<compile_context>
chip_gen: v7x
topology: tpu7x:2x2x1
jax: 0.10.0
libtpu: 0.0.40
codegen_flags: <defaults>
</compile_context>

<pallas_src>
import jax
import jax.numpy as jnp
from jax.experimental import pallas as pl
from jax.experimental.pallas import tpu as pltpu


# ----------------------------- kernels --------------------------------------

def _mlp_sigmoid_softmax_kernel(x_ref, w1_ref, b1_ref, dw2_ref, db2_ref, o_ref):
    """h = relu(x@W1 + b1); d = h@(w2[:,0]-w2[:,1]) + (b2[0]-b2[1]);
    out = [sigmoid(d), 1 - sigmoid(d)]  ==  softmax(relu(x@W1+b1)@W2 + b2, axis=1)."""
    x = x_ref[...]
    h = jnp.dot(x, w1_ref[...], preferred_element_type=jnp.float32) + b1_ref[...]
    h = jnp.maximum(h, 0.0)
    d = jnp.dot(h, dw2_ref[...], preferred_element_type=jnp.float32) + db2_ref[0]
    p0 = 1.0 / (1.0 + jnp.exp(-d))                      # (TB, 1)
    o_ref[:, 0:1] = p0.astype(o_ref.dtype)
    o_ref[:, 1:2] = (1.0 - p0).astype(o_ref.dtype)


def _linear_sigmoid_softmax_kernel(x_ref, dw_ref, db_ref, o_ref):
    """l1 == 0 branch: d = x@(w[:,0]-w[:,1]) + (b[0]-b[1]); out = [sig(d), 1-sig(d)]."""
    d = jnp.dot(x_ref[...], dw_ref[...], preferred_element_type=jnp.float32) + db_ref[0]
    p0 = 1.0 / (1.0 + jnp.exp(-d))
    o_ref[:, 0:1] = p0.astype(o_ref.dtype)
    o_ref[:, 1:2] = (1.0 - p0).astype(o_ref.dtype)


# ----------------------------- wrappers --------------------------------------

def _round_up(x, m):
    return (x + m - 1) // m * m


def _choose_batch_tile(B, F, block_b=None):
    """Largest batch tile that fits a conservative VMEM budget.

    12 MiB for the double-buffered f32 x tile keeps us under v5e's ~16 MiB
    scoped-VMEM default (v6e/v7x default 32 MiB; v7x physical VMEM 64 MiB).
    """
    budget = 12 * 1024 * 1024
    per_row = 2 * F * 4                         # double-buffered f32 rows of x
    max_rows = min(max(budget // per_row, 128), 2048)
    if block_b is not None:
        max_rows = min(max_rows, max(int(block_b), 8))
    # Small batches: one full-extent block (no padding, no boundary masking).
    if B <= min(max_rows, 1024):
        return B
    tb = max((max_rows // 128) * 128, 128)      # multiple of 128 (sublane/lane friendly)
    # Keep >= 2 grid steps so both TensorCores get work on v7x.
    half = _round_up(-(-B // 2), 128)
    return max(min(tb, half), 128)


def simple_model_forward(x, params, l1, *, block_b=None):
    """Pallas forward pass matching torch SimpleModel(input_shape, l1)."""
    B, F = x.shape
    TB = _choose_batch_tile(B, F, block_b)
    grid = (pl.cdiv(B, TB),)

    x_spec = pl.BlockSpec((TB, F), lambda i: (i, 0))
    out_spec = pl.BlockSpec((TB, 2), lambda i: (i, 0))
    out_shape = jax.ShapeDtypeStruct((B, 2), jnp.float32)
    smem_spec = pl.BlockSpec(memory_space=pltpu.MemorySpace.SMEM)
    cparams = pltpu.CompilerParams(dimension_semantics=("parallel",))

    if l1 == 0:
        w, b = params["w"], params["b"]
        # Fold the 2-class softmax: only the logit-difference column is needed.
        dw = w[:, 0:1] - w[:, 1:2]               # (F, 1)
        db = b[:, 0] - b[:, 1]                   # (1,)  scalar -> SMEM
        cost = pl.CostEstimate(
            flops=2 * B * F + 6 * B,
            transcendentals=B,
            bytes_accessed=(B * F + F + 1 + B * 2) * 4,
        )
        out = pl.pallas_call(
            _linear_sigmoid_softmax_kernel,
            out_shape=out_shape,
            grid=grid,
            in_specs=[
                x_spec,
                pl.BlockSpec((F, 1), lambda i: (0, 0)),   # VMEM-resident weights
                smem_spec,
            ],
            out_specs=out_spec,
            compiler_params=cparams,
            cost_estimate=cost,
        )(x, dw, db)
    else:
        w1, b1, w2, b2 = params["w1"], params["b1"], params["w2"], params["b2"]
        L1 = w1.shape[1]
        dw2 = w2[:, 0:1] - w2[:, 1:2]            # (L1, 1)
        db2 = b2[:, 0] - b2[:, 1]                # (1,)  scalar -> SMEM
        cost = pl.CostEstimate(
            flops=2 * B * F * L1 + 2 * B * L1 + 6 * B,
            transcendentals=B,
            bytes_accessed=(B * F + F * L1 + L1 + L1 + 1 + B * 2) * 4,
        )
        out = pl.pallas_call(
            _mlp_sigmoid_softmax_kernel,
            out_shape=out_shape,
            grid=grid,
            in_specs=[
                x_spec,
                pl.BlockSpec((F, L1), lambda i: (0, 0)),  # VMEM-resident weights
                pl.BlockSpec((1, L1), lambda i: (0, 0)),
                pl.BlockSpec((L1, 1), lambda i: (0, 0)),
                smem_spec,
            ],
            out_specs=out_spec,
            compiler_params=cparams,
            cost_estimate=cost,
        )(x, w1, b1, dw2, db2)

    return out


def init_params(key, input_shape, l1):
    """Deterministic torch-Linear-style init (uniform +/- 1/sqrt(fan_in))."""
    def linear(k, fan_in, fan_out):
        kw, kb = jax.random.split(k)
        bound = 1.0 / jnp.sqrt(float(fan_in))
        w = jax.random.uniform(kw, (fan_in, fan_out), jnp.float32, -bound, bound)
        b = jax.random.uniform(kb, (1, fan_out), jnp.float32, -bound, bound)
        return w, b

    if l1 == 0:
        w, b = linear(key, input_shape, 2)
        return {"w": w, "b": b}
    k1, k2 = jax.random.split(key)
    w1, b1 = linear(k1, input_shape, l1)
    w2, b2 = linear(k2, l1, 2)
    return {"w1": w1, "b1": b1, "w2": w2, "b2": b2}


def reference_forward(x, params, l1):
    """Pure-JAX reference for a correctness check."""
    if l1 == 0:
        logits = x @ params["w"] + params["b"]
    else:
        h = jnp.maximum(x @ params["w1"] + params["b1"], 0.0)
        logits = h @ params["w2"] + params["b2"]
    return jax.nn.softmax(logits, axis=1)


# ------------------------------- main ----------------------------------------

if __name__ == "__main__":
    key = jax.random.PRNGKey(0)
    kx, kp1, kp2 = jax.random.split(key, 3)

    B, INPUT_SHAPE, L1 = 200, 32, 16
    x = jax.random.normal(kx, (B, INPUT_SHAPE), jnp.float32)

    # Branch with hidden layer (l1 > 0): single full-extent block (grid=(1,)).
    params_mlp = init_params(kp1, INPUT_SHAPE, L1)
    out_mlp = jax.block_until_ready(simple_model_forward(x, params_mlp, L1))
    ref_mlp = reference_forward(x, params_mlp, L1)
    assert out_mlp.shape == (B, 2)
    assert jnp.allclose(out_mlp, ref_mlp, atol=1e-5, rtol=1e-5)
    assert jnp.allclose(jnp.sum(out_mlp, axis=1), 1.0, atol=1e-5)

    # Same branch, forced multi-step grid (B=200, TB=128 -> grid=(2,)) to
    # exercise the masked partial boundary block (no host-side padding).
    out_tiled = jax.block_until_ready(
        simple_model_forward(x, params_mlp, L1, block_b=128))
    assert out_tiled.shape == (B, 2)
    assert jnp.allclose(out_tiled, ref_mlp, atol=1e-5, rtol=1e-5)

    # Branch without hidden layer (l1 == 0).
    params_lin = init_params(kp2, INPUT_SHAPE, 0)
    out_lin = jax.block_until_ready(simple_model_forward(x, params_lin, 0))
    ref_lin = reference_forward(x, params_lin, 0)
    assert out_lin.shape == (B, 2)
    assert jnp.allclose(out_lin, ref_lin, atol=1e-5, rtol=1e-5)

    # Small-batch sanity check (single full-extent block).
    x_small = x[:8]
    out_small = jax.block_until_ready(simple_model_forward(x_small, params_mlp, L1))
    assert out_small.shape == (8, 2)
    assert jnp.allclose(out_small, ref_mlp[:8], atol=1e-5, rtol=1e-5)

    print("KERNEL_OK")
</pallas_src>

<mosaic_0001>
module attributes {stable_mosaic.version = 11 : i64} {
  func.func @_mlp_sigmoid_softmax_kernel(%arg0: i32, %arg1: memref<200x32xf32, #tpu.memory_space<vmem>>, %arg2: memref<32x16xf32, #tpu.memory_space<vmem>>, %arg3: memref<1x16xf32, #tpu.memory_space<vmem>>, %arg4: memref<16x1xf32, #tpu.memory_space<vmem>>, %arg5: memref<1xf32, #tpu.memory_space<smem>>, %arg6: memref<200x2xf32, #tpu.memory_space<vmem>>) attributes {dimension_semantics = [#tpu.dimension_semantics<parallel>], iteration_bounds = array<i64: 1>, scalar_prefetch = 0 : i64, scratch_operands = 0 : i64, tpu.core_type = #tpu.core_type<tc>, window_params = [{transform_indices = @transform_0, window_bounds = array<i64: 200, 32>}, {pipeline_mode = #tpu.pipeline_mode<synchronous>, transform_indices = @transform_1, window_bounds = array<i64: 32, 16>}, {pipeline_mode = #tpu.pipeline_mode<synchronous>, transform_indices = @transform_2, window_bounds = array<i64: 1, 16>}, {pipeline_mode = #tpu.pipeline_mode<synchronous>, transform_indices = @transform_3, window_bounds = array<i64: 16, 1>}, {transform_indices = @transform_4, window_bounds = array<i64: 1>}, {transform_indices = @transform_5, window_bounds = array<i64: 200, 2>}]} {
    %c0 = arith.constant 0 : index
    %c0_0 = arith.constant 0 : index
    %0 = vector.load %arg1[%c0, %c0_0] : memref<200x32xf32, #tpu.memory_space<vmem>>, vector<200x32xf32>
    %c0_1 = arith.constant 0 : index
    %c0_2 = arith.constant 0 : index
    %1 = vector.load %arg2[%c0_1, %c0_2] : memref<32x16xf32, #tpu.memory_space<vmem>>, vector<32x16xf32>
    %cst = arith.constant dense<0.000000e+00> : vector<200x16xf32>
    %2 = tpu.matmul %0, %1, %cst {dimension_numbers = #tpu.dot_dimension_numbers<[1], [0], [0], [1], [0, 0, 1, 1], [], []>} : vector<200x32xf32>, vector<32x16xf32>, vector<200x16xf32> -> vector<200x16xf32>
    %c0_3 = arith.constant 0 : index
    %c0_4 = arith.constant 0 : index
    %3 = vector.load %arg3[%c0_3, %c0_4] : memref<1x16xf32, #tpu.memory_space<vmem>>, vector<1x16xf32>
    %4 = vector.broadcast %3 : vector<1x16xf32> to vector<200x16xf32>
    %5 = arith.addf %2, %4 : vector<200x16xf32>
    %cst_5 = arith.constant 0.000000e+00 : f32
    %6 = vector.broadcast %cst_5 : f32 to vector<200x16xf32>
    %7 = arith.maximumf %5, %6 : vector<200x16xf32>
    %c0_6 = arith.constant 0 : index
    %c0_7 = arith.constant 0 : index
    %8 = vector.load %arg4[%c0_6, %c0_7] : memref<16x1xf32, #tpu.memory_space<vmem>>, vector<16x1xf32>
    %cst_8 = arith.constant dense<0.000000e+00> : vector<200x1xf32>
    %9 = tpu.matmul %7, %8, %cst_8 {dimension_numbers = #tpu.dot_dimension_numbers<[1], [0], [0], [1], [0, 0, 1, 1], [], []>} : vector<200x16xf32>, vector<16x1xf32>, vector<200x1xf32> -> vector<200x1xf32>
    %c0_9 = arith.constant 0 : index
    %10 = memref.load %arg5[%c0_9] : memref<1xf32, #tpu.memory_space<smem>>
    %11 = vector.broadcast %10 : f32 to vector<200x1xf32>
    %12 = arith.addf %9, %11 : vector<200x1xf32>
    %cst_10 = arith.constant 0.000000e+00 : f32
    %13 = vector.broadcast %cst_10 : f32 to vector<200x1xf32>
    %14 = arith.subf %13, %12 : vector<200x1xf32>
    %15 = math.exp %14 : vector<200x1xf32>
    %cst_11 = arith.constant 1.000000e+00 : f32
    %16 = vector.broadcast %cst_11 : f32 to vector<200x1xf32>
    %17 = arith.addf %16, %15 : vector<200x1xf32>
    %cst_12 = arith.constant 1.000000e+00 : f32
    %18 = vector.broadcast %cst_12 : f32 to vector<200x1xf32>
    %19 = arith.divf %18, %17 : vector<200x1xf32>
    %c0_13 = arith.constant 0 : index
    %c0_14 = arith.constant 0 : index
    %20 = vector.load %arg6[%c0_13, %c0_14] : memref<200x2xf32, #tpu.memory_space<vmem>>, vector<200x1xf32>
    tpu.vector_store %arg6[%c0_13, %c0_14], %19 {strides = array<i32>} : memref<200x2xf32, #tpu.memory_space<vmem>>, vector<200x1xf32>,
    %cst_15 = arith.constant 1.000000e+00 : f32
    %21 = vector.broadcast %cst_15 : f32 to vector<200x1xf32>
    %22 = arith.subf %21, %19 : vector<200x1xf32>
    %c0_16 = arith.constant 0 : index
    %c1 = arith.constant 1 : index
    %23 = vector.load %arg6[%c0_16, %c1] : memref<200x2xf32, #tpu.memory_space<vmem>>, vector<200x1xf32>
    tpu.vector_store %arg6[%c0_16, %c1], %22 {strides = array<i32>} : memref<200x2xf32, #tpu.memory_space<vmem>>, vector<200x1xf32>,
    return
  }
  func.func @transform_0(%arg0: i32) -> (i32, i32) {
    %c0_i32 = arith.constant 0 : i32
    %c0_i32_0 = arith.constant 0 : i32
    return %arg0, %c0_i32 : i32, i32
  }
  func.func @transform_1(%arg0: i32) -> (i32, i32) {
    %c0_i32 = arith.constant 0 : i32
    %c0_i32_0 = arith.constant 0 : i32
    %c0_i32_1 = arith.constant 0 : i32
    return %c0_i32, %c0_i32_0 : i32, i32
  }
  func.func @transform_2(%arg0: i32) -> (i32, i32) {
    %c0_i32 = arith.constant 0 : i32
    %c0_i32_0 = arith.constant 0 : i32
    %c0_i32_1 = arith.constant 0 : i32
    return %c0_i32, %c0_i32_0 : i32, i32
  }
  func.func @transform_3(%arg0: i32) -> (i32, i32) {
    %c0_i32 = arith.constant 0 : i32
    %c0_i32_0 = arith.constant 0 : i32
    %c0_i32_1 = arith.constant 0 : i32
    return %c0_i32, %c0_i32_0 : i32, i32
  }
  func.func @transform_4(%arg0: i32) -> i32 {
    %c0_i32 = arith.constant 0 : i32
    %c0_i32_0 = arith.constant 0 : i32
    return %c0_i32 : i32
  }
  func.func @transform_5(%arg0: i32) -> (i32, i32) {
    %c0_i32 = arith.constant 0 : i32
    %c0_i32_0 = arith.constant 0 : i32
    return %arg0, %c0_i32 : i32, i32
  }
}

</mosaic_0001>

<llo_original>
// kernel: tpu_custom_call.1
$region0: #{tpu_custom_call.1}
  #allocation0 [shape = 'u32[]', space=smem, size = 0x4, offset = 0x4, fixed_abs, tag = 'smem constant byte address 0x4 - core index']
  #allocation1 [shape = 'u32[144,128]{1,0:T(1,128)}', space=vmem, size = 0x12000, scoped, tag = 'internal scratch']
  #allocation2 [shape = 'f32[1]{0:T(128)S(6)}', space=smem, size = 0x200, scoped, tag = 'scoped memory for tpu_custom_call.1']
  %s0 = inlined_call_operand.vmem [shape: f32[200,32], index: 0, kind: input, shape index: {}]
  %s1 = inlined_call_operand.vmem [shape: f32[32,16], index: 1, kind: input, shape index: {}]
  %s2 = inlined_call_operand.vmem [shape: f32[1,16], index: 2, kind: input, shape index: {}]
  %s3 = inlined_call_operand.vmem [shape: f32[16,1], index: 3, kind: input, shape index: {}]
  %s4 = inlined_call_operand.<no memory space> [shape: f32[1], index: 4, kind: input, shape index: {}]
  %s5 = inlined_call_operand.vmem [shape: f32[200,2], index: 5, kind: output, shape index: {}]
  %s6 = sld [smem:[#allocation0]]
  $region30: #{tpu_custom_call.1} parent=0
    _
  %s8 = ssub.s32 1, %s6
  %s9 = scalar_select 0, %s8, %s6
  %10 = sst [smem:[#allocation2]] %s4
  // Predicated region
  $region2: #{tpu_custom_call.1} parent=0 // pred_check
    _
  $region3: #{tpu_custom_call.1} parent=0 // pred_check_branch
    %12 = sbr.rel (0) target = $region5
  $region4: #{tpu_custom_call.1} parent=0 // pred_region
    _
  $region5: #{tpu_custom_call.1} parent=0 // pred_fallthru
    _
  // Predicated region
  $region6: #{tpu_custom_call.1} parent=0 // pred_check
    _
  $region7: #{tpu_custom_call.1} parent=0 // pred_check_branch
    %14 = sbr.rel (0) target = $region9
  $region8: #{tpu_custom_call.1} parent=0 // pred_region
    _
  $region9: #{tpu_custom_call.1} parent=0 // pred_fallthru
    _
  // Predicated region
  $region10: #{tpu_custom_call.1} parent=0 // pred_check
    _
  $region11: #{tpu_custom_call.1} parent=0 // pred_check_branch
    %16 = sbr.rel (0) target = $region13
  $region12: #{tpu_custom_call.1} parent=0 // pred_region
    _
  $region13: #{tpu_custom_call.1} parent=0 // pred_fallthru
    _
  // Predicated region
  $region14: #{tpu_custom_call.1} parent=0 // pred_check
    _
  $region15: #{tpu_custom_call.1} parent=0 // pred_check_branch
    %18 = sbr.rel (0) target = $region17
  $region16: #{tpu_custom_call.1} parent=0 // pred_region
    _
  $region17: #{tpu_custom_call.1} parent=0 // pred_fallthru
    _
  // Predicated region
  $region18: #{tpu_custom_call.1} parent=0 // pred_check
    _
  $region19: #{tpu_custom_call.1} parent=0 // pred_check_branch
    %20 = sbr.rel (0) target = $region21
  $region20: #{tpu_custom_call.1} parent=0 // pred_region
    _
  $region21: #{tpu_custom_call.1} parent=0 // pred_fallthru
    _
  %v21 = vld [vmem:[%s0] sm:$0xff]
  %v22 = vld [vmem:[%s0 + $0x8] sm:$0xff]
  %v23 = vld [vmem:[%s0 + $0x10] sm:$0xff]
  %v24 = vld [vmem:[%s0 + $0x18] sm:$0xff]
  %v25 = vld [vmem:[%s0 + $0x20] sm:$0xff]
  %v26 = vld [vmem:[%s0 + $0x28] sm:$0xff]
  %v27 = vld [vmem:[%s0 + $0x30] sm:$0xff]
  %v28 = vld [vmem:[%s0 + $0x38] sm:$0xff]
  %v29 = vld [vmem:[%s0 + $0x40] sm:$0xff]
  %v30 = vld [vmem:[%s0 + $0x48] sm:$0xff]
  %v31 = vld [vmem:[%s0 + $0x50] sm:$0xff]
  %v32 = vld [vmem:[%s0 + $0x58] sm:$0xff]
  %v33 = vld [vmem:[%s0 + $0x60] sm:$0xff]
  %v34 = vld [vmem:[%s0 + $0x68] sm:$0xff]
  %v35 = vld [vmem:[%s0 + $0x70] sm:$0xff]
  %v36 = vld [vmem:[%s0 + $0x78] sm:$0xff]
  %v37 = vld [vmem:[%s0 + $0x80] sm:$0xff]
  %v38 = vld [vmem:[%s0 + $0x88] sm:$0xff]
  %v39 = vld [vmem:[%s0 + $0x90] sm:$0xff]
  %v40 = vld [vmem:[%s0 + $0x98] sm:$0xff]
  %v41 = vld [vmem:[%s0 + $0xa0] sm:$0xff]
  %v42 = vld [vmem:[%s0 + $0xa8] sm:$0xff]
  %v43 = vld [vmem:[%s0 + $0xb0] sm:$0xff]
  %v44 = vld [vmem:[%s0 + $0xb8] sm:$0xff]
  %v45 = vld [vmem:[%s0 + $0xc0] sm:$0xff]
  %v46 = vld [vmem:[%s1] sm:$0xff]
  %v47 = vld [vmem:[%s1 + $0x8] sm:$0xff]
  %v48 = vld [vmem:[%s1 + $0x10] sm:$0xff]
  %v49 = vld [vmem:[%s1 + $0x18] sm:$0xff]
  %v50 = vld [vmem:[%s2] sm:$0x1]
  %v52 = vlaneseq
  %v53 = vshrl.u32 %v52, 7
  %v54 = vsub.s32 0, %v53
  %v55 = vrot.slane %v50, %v54
  %vm57 = vcmask 261120
  %v59 = vsel %vm57, %v21, 0
  %v62 = vsel %vm57, %v22, 0
  %v65 = vsel %vm57, %v23, 0
  %v68 = vsel %vm57, %v24, 0
  %v71 = vsel %vm57, %v25, 0
  %v74 = vsel %vm57, %v26, 0
  %v77 = vsel %vm57, %v27, 0
  %v80 = vsel %vm57, %v28, 0
  %v83 = vsel %vm57, %v29, 0
  %v86 = vsel %vm57, %v30, 0
  %v89 = vsel %vm57, %v31, 0
  %v92 = vsel %vm57, %v32, 0
  %v95 = vsel %vm57, %v33, 0
  %v98 = vsel %vm57, %v34, 0
  %v101 = vsel %vm57, %v35, 0
  %v104 = vsel %vm57, %v36, 0
  %v107 = vsel %vm57, %v37, 0
  %v110 = vsel %vm57, %v38, 0
  %v113 = vsel %vm57, %v39, 0
  %v116 = vsel %vm57, %v40, 0
  %v119 = vsel %vm57, %v41, 0
  %v122 = vsel %vm57, %v42, 0
  %v125 = vsel %vm57, %v43, 0
  %v128 = vsel %vm57, %v44, 0
  %v131 = vsel %vm57, %v45, 0
  %133 = vmatprep.subr.mxu0 0.0
  %134 = vmatpush1.msra.mxu0 %v46
  %135 = vmatprep.subr.mxu0 0.0
  %136 = vmatpush1.msra.mxu0 %v47
  %137 = vmatprep.subr.mxu0 0.0
  %138 = vmatpush1.msra.mxu0 %v48
  %139 = vmatprep.subr.mxu0 0.0
  %140 = vmatpush1.msra.mxu0 %v49
  %141 = vmatprep.subr.mxu0 0.0
  %142 = vmatpush1.msra.mxu0 0.0
  %143 = vmatprep.subr.mxu0 0.0
  %144 = vmatpush1.msra.mxu0 0.0
  %145 = vmatprep.subr.mxu0 0.0
  %146 = vmatpush1.msra.mxu0 0.0
  %147 = vmatprep.subr.mxu0 0.0
  %148 = vmatpush1.msra.mxu0 0.0
  %149 = vmatprep.subr.mxu0 0.0
  %150 = vmatpush1.msra.mxu0 0.0
  %151 = vmatprep.subr.mxu0 0.0
  %152 = vmatpush1.msra.mxu0 0.0
  %153 = vmatprep.subr.mxu0 0.0
  %154 = vmatpush1.msra.mxu0 0.0
  %155 = vmatprep.subr.mxu0 0.0
  %156 = vmatpush1.msra.mxu0 0.0
  %157 = vmatprep.subr.mxu0 0.0
  %158 = vmatpush1.msra.mxu0 0.0
  %159 = vmatprep.subr.mxu0 0.0
  %160 = vmatpush1.msra.mxu0 0.0
  %161 = vmatprep.subr.mxu0 0.0
  %162 = vmatpush1.msra.mxu0 0.0
  %163 = vmatprep.subr.mxu0 0.0
  %164 = vmatpush1.msra.mxu0 0.0
  %165 = vmatprep.subr.mxu0 0.0
  %166 = vmatpush1.msra.mxu0 0.0
  %167 = vmatprep.subr.mxu0 0.0
  %168 = vmatpush1.msra.mxu0 0.0
  %169 = vmatprep.subr.mxu0 0.0
  %170 = vmatpush1.msra.mxu0 0.0
  %171 = vmatprep.subr.mxu0 0.0
  %172 = vmatpush1.msra.mxu0 0.0
  %173 = vmatprep.subr.mxu0 0.0
  %174 = vmatpush1.msra.mxu0 0.0
  %175 = vmatprep.subr.mxu0 0.0
  %176 = vmatpush1.msra.mxu0 0.0
  %177 = vmatprep.subr.mxu0 0.0
  %178 = vmatpush1.msra.mxu0 0.0
  %179 = vmatprep.subr.mxu0 0.0
  %180 = vmatpush1.msra.mxu0 0.0
  %181 = vmatprep.subr.mxu0 0.0
  %182 = vmatpush1.msra.mxu0 0.0
  %183 = vmatprep.subr.mxu0 0.0
  %184 = vmatpush1.msra.mxu0 0.0
  %185 = vmatprep.subr.mxu0 0.0
  %186 = vmatpush1.msra.mxu0 0.0
  %187 = vmatprep.subr.mxu0 0.0
  %188 = vmatpush1.msra.mxu0 0.0
  %189 = vmatprep.subr.mxu0 0.0
  %190 = vmatpush1.msra.mxu0 0.0
  %191 = vmatprep.subr.mxu0 0.0
  %192 = vmatpush1.msra.mxu0 0.0
  %193 = vmatprep.subr.mxu0 0.0
  %194 = vmatpush1.msra.mxu0 0.0
  %195 = vmatprep.subr.mxu0 0.0
  %196 = vmatpush1.msra.mxu0 0.0
  %197 = vmatprep.mubr.f32.mxu0 0.0
  %198 = vmatmul.mubr.f32.gmra.mrb[0].mxu0 %v59
  %v199 = vpop.f32.mrb[0].mxu0
  %v200 = vadd.f32 %v55, %v199
  %v201 = vpop.f32.mrb[0].mxu0
  %202 = vmatprep.mubr.f32.mxu0 0.0
  %203 = vmatmul.mubr.f32.gmra.mrb[0].mxu0 %v62
  %v204 = vpop.f32.mrb[0].mxu0
  %v205 = vadd.f32 %v55, %v204
  %v206 = vpop.f32.mrb[0].mxu0
  %207 = vmatprep.mubr.f32.mxu0 0.0
  %208 = vmatmul.mubr.f32.gmra.mrb[0].mxu0 %v65
  %v209 = vpop.f32.mrb[0].mxu0
  %v210 = vadd.f32 %v55, %v209
  %v211 = vpop.f32.mrb[0].mxu0
  %212 = vmatprep.mubr.f32.mxu0 0.0
  %213 = vmatmul.mubr.f32.gmra.mrb[0].mxu0 %v68
  %v214 = vpop.f32.mrb[0].mxu0
  %v215 = vadd.f32 %v55, %v214
  %v216 = vpop.f32.mrb[0].mxu0
  %217 = vmatprep.mubr.f32.mxu0 0.0
  %218 = vmatmul.mubr.f32.gmra.mrb[0].mxu0 %v71
  %v219 = vpop.f32.mrb[0].mxu0
  %v220 = vadd.f32 %v55, %v219
  %v221 = vpop.f32.mrb[0].mxu0
  %222 = vmatprep.mubr.f32.mxu0 0.0
  %223 = vmatmul.mubr.f32.gmra.mrb[0].mxu0 %v74
  %v224 = vpop.f32.mrb[0].mxu0
  %v225 = vadd.f32 %v55, %v224
  %v226 = vpop.f32.mrb[0].mxu0
  %227 = vmatprep.mubr.f32.mxu0 0.0
  %228 = vmatmul.mubr.f32.gmra.mrb[0].mxu0 %v77
  %v229 = vpop.f32.mrb[0].mxu0
  %v230 = vadd.f32 %v55, %v229
  %v231 = vpop.f32.mrb[0].mxu0
  %232 = vmatprep.mubr.f32.mxu0 0.0
  %233 = vmatmul.mubr.f32.gmra.mrb[0].mxu0 %v80
  %v234 = vpop.f32.mrb[0].mxu0
  %v235 = vadd.f32 %v55, %v234
  %v236 = vpop.f32.mrb[0].mxu0
  %237 = vmatprep.mubr.f32.mxu0 0.0
  %238 = vmatmul.mubr.f32.gmra.mrb[0].mxu0 %v83
  %v239 = vpop.f32.mrb[0].mxu0
  %v240 = vadd.f32 %v55, %v239
  %v241 = vpop.f32.mrb[0].mxu0
  %242 = vmatprep.mubr.f32.mxu0 0.0
  %243 = vmatmul.mubr.f32.gmra.mrb[0].mxu0 %v86
  %v244 = vpop.f32.mrb[0].mxu0
  %v245 = vadd.f32 %v55, %v244
  %v246 = vpop.f32.mrb[0].mxu0
  %247 = vmatprep.mubr.f32.mxu0 0.0
  %248 = vmatmul.mubr.f32.gmra.mrb[0].mxu0 %v89
  %v249 = vpop.f32.mrb[0].mxu0
  %v250 = vadd.f32 %v55, %v249
  %v251 = vpop.f32.mrb[0].mxu0
  %252 = vmatprep.mubr.f32.mxu0 0.0
  %253 = vmatmul.mubr.f32.gmra.mrb[0].mxu0 %v92
  %v254 = vpop.f32.mrb[0].mxu0
  %v255 = vadd.f32 %v55, %v254
  %v256 = vpop.f32.mrb[0].mxu0
  %257 = vmatprep.mubr.f32.mxu0 0.0
  %258 = vmatmul.mubr.f32.gmra.mrb[0].mxu0 %v95
  %v259 = vpop.f32.mrb[0].mxu0
  %v260 = vadd.f32 %v55, %v259
  %v261 = vpop.f32.mrb[0].mxu0
  %262 = vmatprep.mubr.f32.mxu0 0.0
  %263 = vmatmul.mubr.f32.gmra.mrb[0].mxu0 %v98
  %v264 = vpop.f32.mrb[0].mxu0
  %v265 = vadd.f32 %v55, %v264
  %v266 = vpop.f32.mrb[0].mxu0
  %267 = vmatprep.mubr.f32.mxu0 0.0
  %268 = vmatmul.mubr.f32.gmra.mrb[0].mxu0 %v101
  %v269 = vpop.f32.mrb[0].mxu0
  %v270 = vadd.f32 %v55, %v269
  %v271 = vpop.f32.mrb[0].mxu0
  %272 = vmatprep.mubr.f32.mxu0 0.0
  %273 = vmatmul.mubr.f32.gmra.mrb[0].mxu0 %v104
  %v274 = vpop.f32.mrb[0].mxu0
  %v275 = vadd.f32 %v55, %v274
  %v276 = vpop.f32.mrb[0].mxu0
  %277 = vmatprep.mubr.f32.mxu0 0.0
  %278 = vmatmul.mubr.f32.gmra.mrb[0].mxu0 %v107
  %v279 = vpop.f32.mrb[0].mxu0
  %v280 = vadd.f32 %v55, %v279
  %v281 = vpop.f32.mrb[0].mxu0
  %282 = vmatprep.mubr.f32.mxu0 0.0
  %283 = vmatmul.mubr.f32.gmra.mrb[0].mxu0 %v110
  %v284 = vpop.f32.mrb[0].mxu0
  %v285 = vadd.f32 %v55, %v284
  %v286 = vpop.f32.mrb[0].mxu0
  %287 = vmatprep.mubr.f32.mxu0 0.0
  %288 = vmatmul.mubr.f32.gmra.mrb[0].mxu0 %v113
  %v289 = vpop.f32.mrb[0].mxu0
  %v290 = vadd.f32 %v55, %v289
  %v291 = vpop.f32.mrb[0].mxu0
  %292 = vmatprep.mubr.f32.mxu0 0.0
  %293 = vmatmul.mubr.f32.gmra.mrb[0].mxu0 %v116
  %v294 = vpop.f32.mrb[0].mxu0
  %v295 = vadd.f32 %v55, %v294
  %v296 = vpop.f32.mrb[0].mxu0
  %297 = vmatprep.mubr.f32.mxu0 0.0
  %298 = vmatmul.mubr.f32.gmra.mrb[0].mxu0 %v119
  %v299 = vpop.f32.mrb[0].mxu0
  %v300 = vadd.f32 %v55, %v299
  %v301 = vpop.f32.mrb[0].mxu0
  %302 = vmatprep.mubr.f32.mxu0 0.0
  %303 = vmatmul.mubr.f32.gmra.mrb[0].mxu0 %v122
  %v304 = vpop.f32.mrb[0].mxu0
  %v305 = vadd.f32 %v55, %v304
  %v306 = vpop.f32.mrb[0].mxu0
  %307 = vmatprep.mubr.f32.mxu0 0.0
  %308 = vmatmul.mubr.f32.gmra.mrb[0].mxu0 %v125
  %v309 = vpop.f32.mrb[0].mxu0
  %v310 = vadd.f32 %v55, %v309
  %v311 = vpop.f32.mrb[0].mxu0
  %312 = vmatprep.mubr.f32.mxu0 0.0
  %313 = vmatmul.mubr.f32.gmra.mrb[0].mxu0 %v128
  %v314 = vpop.f32.mrb[0].mxu0
  %v315 = vadd.f32 %v55, %v314
  %v316 = vpop.f32.mrb[0].mxu0
  %317 = vmatprep.mubr.f32.mxu0 0.0
  %318 = vmatmul.mubr.f32.gmra.mrb[0].mxu0 %v131
  %v319 = vpop.f32.mrb[0].mxu0
  %v320 = vadd.f32 %v55, %v319
  %v321 = vpop.f32.mrb[0].mxu0
  %322 = vdwg.mxu0
  %v323 = vmax.f32 %v200, 0.0
  %v324 = vmax.f32 %v205, 0.0
  %v325 = vmax.f32 %v210, 0.0
  %v326 = vmax.f32 %v215, 0.0
  %v327 = vmax.f32 %v220, 0.0
  %v328 = vmax.f32 %v225, 0.0
  %v329 = vmax.f32 %v230, 0.0
  %v330 = vmax.f32 %v235, 0.0
  %v331 = vmax.f32 %v240, 0.0
  %v332 = vmax.f32 %v245, 0.0
  %v333 = vmax.f32 %v250, 0.0
  %v334 = vmax.f32 %v255, 0.0
  %v335 = vmax.f32 %v260, 0.0
  %v336 = vmax.f32 %v265, 0.0
  %v337 = vmax.f32 %v270, 0.0
  %v338 = vmax.f32 %v275, 0.0
  %v339 = vmax.f32 %v280, 0.0
  %v340 = vmax.f32 %v285, 0.0
  %v341 = vmax.f32 %v290, 0.0
  %v342 = vmax.f32 %v295, 0.0
  %v343 = vmax.f32 %v300, 0.0
  %v344 = vmax.f32 %v305, 0.0
  %v345 = vmax.f32 %v310, 0.0
  %v346 = vmax.f32 %v315, 0.0
  %v347 = vmax.f32 %v320, 0.0
  %v348 = vld [vmem:[%s3] sm:$0xff]
  %v349 = vld [vmem:[%s3 + $0x8] sm:$0xff]
  %s350 = sld [smem:[#allocation2]]
  %v351 = vstv %s350
  %vm352 = vcmask 130048
  %v354 = vsel %vm352, %v323, 0
  %v357 = vsel %vm352, %v324, 0
  %v360 = vsel %vm352, %v325, 0
  %v363 = vsel %vm352, %v326, 0
  %v366 = vsel %vm352, %v327, 0
  %v369 = vsel %vm352, %v328, 0
  %v372 = vsel %vm352, %v329, 0
  %v375 = vsel %vm352, %v330, 0
  %v378 = vsel %vm352, %v331, 0
  %v381 = vsel %vm352, %v332, 0
  %v384 = vsel %vm352, %v333, 0
  %v387 = vsel %vm352, %v334, 0
  %v390 = vsel %vm352, %v335, 0
  %v393 = vsel %vm352, %v336, 0
  %v396 = vsel %vm352, %v337, 0
  %v399 = vsel %vm352, %v338, 0
  %v402 = vsel %vm352, %v339, 0
  %v405 = vsel %vm352, %v340, 0
  %v408 = vsel %vm352, %v341, 0
  %v411 = vsel %vm352, %v342, 0
  %v414 = vsel %vm352, %v343, 0
  %v417 = vsel %vm352, %v344, 0
  %v420 = vsel %vm352, %v345, 0
  %v423 = vsel %vm352, %v346, 0
  %v426 = vsel %vm352, %v347, 0
  %428 = vmatprep.subr.mxu0 0.0
  %429 = vmatpush1.msra.mxu0 %v348
  %430 = vmatprep.subr.mxu0 0.0
  %431 = vmatpush1.msra.mxu0 %v349
  %432 = vmatprep.subr.mxu0 0.0
  %433 = vmatpush1.msra.mxu0 0.0
  %434 = vmatprep.subr.mxu0 0.0
  %435 = vmatpush1.msra.mxu0 0.0
  %436 = vmatprep.subr.mxu0 0.0
  %437 = vmatpush1.msra.mxu0 0.0
  %438 = vmatprep.subr.mxu0 0.0
  %439 = vmatpush1.msra.mxu0 0.0
  %440 = vmatprep.subr.mxu0 0.0
  %441 = vmatpush1.msra.mxu0 0.0
  %442 = vmatprep.subr.mxu0 0.0
  %443 = vmatpush1.msra.mxu0 0.0
  %444 = vmatprep.subr.mxu0 0.0
  %445 = vmatpush1.msra.mxu0 0.0
  %446 = vmatprep.subr.mxu0 0.0
  %447 = vmatpush1.msra.mxu0 0.0
  %448 = vmatprep.subr.mxu0 0.0
  %449 = vmatpush1.msra.mxu0 0.0
  %450 = vmatprep.subr.mxu0 0.0
  %451 = vmatpush1.msra.mxu0 0.0
  %452 = vmatprep.subr.mxu0 0.0
  %453 = vmatpush1.msra.mxu0 0.0
  %454 = vmatprep.subr.mxu0 0.0
  %455 = vmatpush1.msra.mxu0 0.0
  %456 = vmatprep.subr.mxu0 0.0
  %457 = vmatpush1.msra.mxu0 0.0
  %458 = vmatprep.subr.mxu0 0.0
  %459 = vmatpush1.msra.mxu0 0.0
  %460 = vmatprep.subr.mxu0 0.0
  %461 = vmatpush1.msra.mxu0 0.0
  %462 = vmatprep.subr.mxu0 0.0
  %463 = vmatpush1.msra.mxu0 0.0
  %464 = vmatprep.subr.mxu0 0.0
  %465 = vmatpush1.msra.mxu0 0.0
  %466 = vmatprep.subr.mxu0 0.0
  %467 = vmatpush1.msra.mxu0 0.0
  %468 = vmatprep.subr.mxu0 0.0
  %469 = vmatpush1.msra.mxu0 0.0
  %470 = vmatprep.subr.mxu0 0.0
  %471 = vmatpush1.msra.mxu0 0.0
  %472 = vmatprep.subr.mxu0 0.0
  %473 = vmatpush1.msra.mxu0 0.0
  %474 = vmatprep.subr.mxu0 0.0
  %475 = vmatpush1.msra.mxu0 0.0
  %476 = vmatprep.subr.mxu0 0.0
  %477 = vmatpush1.msra.mxu0 0.0
  %478 = vmatprep.subr.mxu0 0.0
  %479 = vmatpush1.msra.mxu0 0.0
  %480 = vmatprep.subr.mxu0 0.0
  %481 = vmatpush1.msra.mxu0 0.0
  %482 = vmatprep.subr.mxu0 0.0
  %483 = vmatpush1.msra.mxu0 0.0
  %484 = vmatprep.subr.mxu0 0.0
  %485 = vmatpush1.msra.mxu0 0.0
  %486 = vmatprep.subr.mxu0 0.0
  %487 = vmatpush1.msra.mxu0 0.0
  %488 = vmatprep.subr.mxu0 0.0
  %489 = vmatpush1.msra.mxu0 0.0
  %490 = vmatprep.subr.mxu0 0.0
  %491 = vmatpush1.msra.mxu0 0.0
  %492 = vmatprep.mubr.f32.mxu0 0.0
  %493 = vmatmul.mubr.f32.gmra.mrb[0].mxu0 %v354
  %v494 = vpop.f32.mrb[0].mxu0
  %v495 = vadd.f32 %v351, %v494
  %v496 = vpop.f32.mrb[0].mxu0
  %497 = vmatprep.mubr.f32.mxu0 0.0
  %498 = vmatmul.mubr.f32.gmra.mrb[0].mxu0 %v357
  %v499 = vpop.f32.mrb[0].mxu0
  %v500 = vadd.f32 %v351, %v499
  %v501 = vpop.f32.mrb[0].mxu0
  %502 = vmatprep.mubr.f32.mxu0 0.0
  %503 = vmatmul.mubr.f32.gmra.mrb[0].mxu0 %v360
  %v504 = vpop.f32.mrb[0].mxu0
  %v505 = vadd.f32 %v351, %v504
  %v506 = vpop.f32.mrb[0].mxu0
  %507 = vmatprep.mubr.f32.mxu0 0.0
  %508 = vmatmul.mubr.f32.gmra.mrb[0].mxu0 %v363
  %v509 = vpop.f32.mrb[0].mxu0
  %v510 = vadd.f32 %v351, %v509
  %v511 = vpop.f32.mrb[0].mxu0
  %512 = vmatprep.mubr.f32.mxu0 0.0
  %513 = vmatmul.mubr.f32.gmra.mrb[0].mxu0 %v366
  %v514 = vpop.f32.mrb[0].mxu0
  %v515 = vadd.f32 %v351, %v514
  %v516 = vpop.f32.mrb[0].mxu0
  %517 = vmatprep.mubr.f32.mxu0 0.0
  %518 = vmatmul.mubr.f32.gmra.mrb[0].mxu0 %v369
  %v519 = vpop.f32.mrb[0].mxu0
  %v520 = vadd.f32 %v351, %v519
  %v521 = vpop.f32.mrb[0].mxu0
  %522 = vmatprep.mubr.f32.mxu0 0.0
  %523 = vmatmul.mubr.f32.gmra.mrb[0].mxu0 %v372
  %v524 = vpop.f32.mrb[0].mxu0
  %v525 = vadd.f32 %v351, %v524
  %v526 = vpop.f32.mrb[0].mxu0
  %527 = vmatprep.mubr.f32.mxu0 0.0
  %528 = vmatmul.mubr.f32.gmra.mrb[0].mxu0 %v375
  %v529 = vpop.f32.mrb[0].mxu0
  %v530 = vadd.f32 %v351, %v529
  %v531 = vpop.f32.mrb[0].mxu0
  %532 = vmatprep.mubr.f32.mxu0 0.0
  %533 = vmatmul.mubr.f32.gmra.mrb[0].mxu0 %v378
  %v534 = vpop.f32.mrb[0].mxu0
  %v535 = vadd.f32 %v351, %v534
  %v536 = vpop.f32.mrb[0].mxu0
  %537 = vmatprep.mubr.f32.mxu0 0.0
  %538 = vmatmul.mubr.f32.gmra.mrb[0].mxu0 %v381
  %v539 = vpop.f32.mrb[0].mxu0
  %v540 = vadd.f32 %v351, %v539
  %v541 = vpop.f32.mrb[0].mxu0
  %542 = vmatprep.mubr.f32.mxu0 0.0
  %543 = vmatmul.mubr.f32.gmra.mrb[0].mxu0 %v384
  %v544 = vpop.f32.mrb[0].mxu0
  %v545 = vadd.f32 %v351, %v544
  %v546 = vpop.f32.mrb[0].mxu0
  %547 = vmatprep.mubr.f32.mxu0 0.0
  %548 = vmatmul.mubr.f32.gmra.mrb[0].mxu0 %v387
  %v549 = vpop.f32.mrb[0].mxu0
  %v550 = vadd.f32 %v351, %v549
  %v551 = vpop.f32.mrb[0].mxu0
  %552 = vmatprep.mubr.f32.mxu0 0.0
  %553 = vmatmul.mubr.f32.gmra.mrb[0].mxu0 %v390
  %v554 = vpop.f32.mrb[0].mxu0
  %v555 = vadd.f32 %v351, %v554
  %v556 = vpop.f32.mrb[0].mxu0
  %557 = vmatprep.mubr.f32.mxu0 0.0
  %558 = vmatmul.mubr.f32.gmra.mrb[0].mxu0 %v393
  %v559 = vpop.f32.mrb[0].mxu0
  %v560 = vadd.f32 %v351, %v559
  %v561 = vpop.f32.mrb[0].mxu0
  %562 = vmatprep.mubr.f32.mxu0 0.0
  %563 = vmatmul.mubr.f32.gmra.mrb[0].mxu0 %v396
  %v564 = vpop.f32.mrb[0].mxu0
  %v565 = vadd.f32 %v351, %v564
  %v566 = vpop.f32.mrb[0].mxu0
  %567 = vmatprep.mubr.f32.mxu0 0.0
  %568 = vmatmul.mubr.f32.gmra.mrb[0].mxu0 %v399
  %v569 = vpop.f32.mrb[0].mxu0
  %v570 = vadd.f32 %v351, %v569
  %v571 = vpop.f32.mrb[0].mxu0
  %572 = vmatprep.mubr.f32.mxu0 0.0
  %573 = vmatmul.mubr.f32.gmra.mrb[0].mxu0 %v402
  %v574 = vpop.f32.mrb[0].mxu0
  %v575 = vadd.f32 %v351, %v574
  %v576 = vpop.f32.mrb[0].mxu0
  %577 = vmatprep.mubr.f32.mxu0 0.0
  %578 = vmatmul.mubr.f32.gmra.mrb[0].mxu0 %v405
  %v579 = vpop.f32.mrb[0].mxu0
  %v580 = vadd.f32 %v351, %v579
  %v581 = vpop.f32.mrb[0].mxu0
  %582 = vmatprep.mubr.f32.mxu0 0.0
  %583 = vmatmul.mubr.f32.gmra.mrb[0].mxu0 %v408
  %v584 = vpop.f32.mrb[0].mxu0
  %v585 = vadd.f32 %v351, %v584
  %v586 = vpop.f32.mrb[0].mxu0
  %587 = vmatprep.mubr.f32.mxu0 0.0
  %588 = vmatmul.mubr.f32.gmra.mrb[0].mxu0 %v411
  %v589 = vpop.f32.mrb[0].mxu0
  %v590 = vadd.f32 %v351, %v589
  %v591 = vpop.f32.mrb[0].mxu0
  %592 = vmatprep.mubr.f32.mxu0 0.0
  %593 = vmatmul.mubr.f32.gmra.mrb[0].mxu0 %v414
  %v594 = vpop.f32.mrb[0].mxu0
  %v595 = vadd.f32 %v351, %v594
  %v596 = vpop.f32.mrb[0].mxu0
  %597 = vmatprep.mubr.f32.mxu0 0.0
  %598 = vmatmul.mubr.f32.gmra.mrb[0].mxu0 %v417
  %v599 = vpop.f32.mrb[0].mxu0
  %v600 = vadd.f32 %v351, %v599
  %v601 = vpop.f32.mrb[0].mxu0
  %602 = vmatprep.mubr.f32.mxu0 0.0
  %603 = vmatmul.mubr.f32.gmra.mrb[0].mxu0 %v420
  %v604 = vpop.f32.mrb[0].mxu0
  %v605 = vadd.f32 %v351, %v604
  %v606 = vpop.f32.mrb[0].mxu0
  %607 = vmatprep.mubr.f32.mxu0 0.0
  %608 = vmatmul.mubr.f32.gmra.mrb[0].mxu0 %v423
  %v609 = vpop.f32.mrb[0].mxu0
  %v610 = vadd.f32 %v351, %v609
  %v611 = vpop.f32.mrb[0].mxu0
  %612 = vmatprep.mubr.f32.mxu0 0.0
  %613 = vmatmul.mubr.f32.gmra.mrb[0].mxu0 %v426
  %v614 = vpop.f32.mrb[0].mxu0
  %v615 = vadd.f32 %v351, %v614
  %v616 = vpop.f32.mrb[0].mxu0
  %617 = vdwg.mxu0
  %v618 = vsub.f32 0.0, %v495
  %v619 = vsub.f32 0.0, %v500
  %v620 = vsub.f32 0.0, %v505
  %v621 = vsub.f32 0.0, %v510
  %v622 = vsub.f32 0.0, %v515
  %v623 = vsub.f32 0.0, %v520
  %v624 = vsub.f32 0.0, %v525
  %v625 = vsub.f32 0.0, %v530
  %v626 = vsub.f32 0.0, %v535
  %v627 = vsub.f32 0.0, %v540
  %v628 = vsub.f32 0.0, %v545
  %v629 = vsub.f32 0.0, %v550
  %v630 = vsub.f32 0.0, %v555
  %v631 = vsub.f32 0.0, %v560
  %v632 = vsub.f32 0.0, %v565
  %v633 = vsub.f32 0.0, %v570
  %v634 = vsub.f32 0.0, %v575
  %v635 = vsub.f32 0.0, %v580
  %v636 = vsub.f32 0.0, %v585
  %v637 = vsub.f32 0.0, %v590
  %v638 = vsub.f32 0.0, %v595
  %v639 = vsub.f32 0.0, %v600
  %v640 = vsub.f32 0.0, %v605
  %v641 = vsub.f32 0.0, %v610
  %v642 = vsub.f32 0.0, %v615
  %v643 = vmul.f32 %v618, 1.442695
  %v644 = vpow.pop %v643
  %v645 = vmul.f32 %v619, 1.442695
  %v646 = vpow.pop %v645
  %v647 = vmul.f32 %v620, 1.442695
  %v648 = vpow.pop %v647
  %v649 = vmul.f32 %v621, 1.442695
  %v650 = vpow.pop %v649
  %v651 = vmul.f32 %v622, 1.442695
  %v652 = vpow.pop %v651
  %v653 = vmul.f32 %v623, 1.442695
  %v654 = vpow.pop %v653
  %v655 = vmul.f32 %v624, 1.442695
  %v656 = vpow.pop %v655
  %v657 = vmul.f32 %v625, 1.442695
  %v658 = vpow.pop %v657
  %v659 = vmul.f32 %v626, 1.442695
  %v660 = vpow.pop %v659
  %v661 = vmul.f32 %v627, 1.442695
  %v662 = vpow.pop %v661
  %v663 = vmul.f32 %v628, 1.442695
  %v664 = vpow.pop %v663
  %v665 = vmul.f32 %v629, 1.442695
  %v666 = vpow.pop %v665
  %v667 = vmul.f32 %v630, 1.442695
  %v668 = vpow.pop %v667
  %v669 = vmul.f32 %v631, 1.442695
  %v670 = vpow.pop %v669
  %v671 = vmul.f32 %v632, 1.442695
  %v672 = vpow.pop %v671
  %v673 = vmul.f32 %v633, 1.442695
  %v674 = vpow.pop %v673
  %v675 = vmul.f32 %v634, 1.442695
  %v676 = vpow.pop %v675
  %v677 = vmul.f32 %v635, 1.442695
  %v678 = vpow.pop %v677
  %v679 = vmul.f32 %v636, 1.442695
  %v680 = vpow.pop %v679
  %v681 = vmul.f32 %v637, 1.442695
  %v682 = vpow.pop %v681
  %v683 = vmul.f32 %v638, 1.442695
  %v684 = vpow.pop %v683
  %v685 = vmul.f32 %v639, 1.442695
  %v686 = vpow.pop %v685
  %v687 = vmul.f32 %v640, 1.442695
  %v688 = vpow.pop %v687
  %v689 = vmul.f32 %v641, 1.442695
  %v690 = vpow.pop %v689
  %v691 = vmul.f32 %v642, 1.442695
  %v692 = vpow.pop %v691
  %v693 = vadd.f32 %v644, 1.0
  %v694 = vadd.f32 %v646, 1.0
  %v695 = vadd.f32 %v648, 1.0
  %v696 = vadd.f32 %v650, 1.0
  %v697 = vadd.f32 %v652, 1.0
  %v698 = vadd.f32 %v654, 1.0
  %v699 = vadd.f32 %v656, 1.0
  %v700 = vadd.f32 %v658, 1.0
  %v701 = vadd.f32 %v660, 1.0
  %v702 = vadd.f32 %v662, 1.0
  %v703 = vadd.f32 %v664, 1.0
  %v704 = vadd.f32 %v666, 1.0
  %v705 = vadd.f32 %v668, 1.0
  %v706 = vadd.f32 %v670, 1.0
  %v707 = vadd.f32 %v672, 1.0
  %v708 = vadd.f32 %v674, 1.0
  %v709 = vadd.f32 %v676, 1.0
  %v710 = vadd.f32 %v678, 1.0
  %v711 = vadd.f32 %v680, 1.0
  %v712 = vadd.f32 %v682, 1.0
  %v713 = vadd.f32 %v684, 1.0
  %v714 = vadd.f32 %v686, 1.0
  %v715 = vadd.f32 %v688, 1.0
  %v716 = vadd.f32 %v690, 1.0
  %v717 = vadd.f32 %v692, 1.0
  %v718 = vrcp.pop %v693
  %v719 = vmul.f32 1.0, %v718
  %v720 = vrcp.pop %v694
  %v721 = vmul.f32 1.0, %v720
  %v722 = vrcp.pop %v695
  %v723 = vmul.f32 1.0, %v722
  %v724 = vrcp.pop %v696
  %v725 = vmul.f32 1.0, %v724
  %v726 = vrcp.pop %v697
  %v727 = vmul.f32 1.0, %v726
  %v728 = vrcp.pop %v698
  %v729 = vmul.f32 1.0, %v728
  %v730 = vrcp.pop %v699
  %v731 = vmul.f32 1.0, %v730
  %v732 = vrcp.pop %v700
  %v733 = vmul.f32 1.0, %v732
  %v734 = vrcp.pop %v701
  %v735 = vmul.f32 1.0, %v734
  %v736 = vrcp.pop %v702
  %v737 = vmul.f32 1.0, %v736
  %v738 = vrcp.pop %v703
  %v739 = vmul.f32 1.0, %v738
  %v740 = vrcp.pop %v704
  %v741 = vmul.f32 1.0, %v740
  %v742 = vrcp.pop %v705
  %v743 = vmul.f32 1.0, %v742
  %v744 = vrcp.pop %v706
  %v745 = vmul.f32 1.0, %v744
  %v746 = vrcp.pop %v707
  %v747 = vmul.f32 1.0, %v746
  %v748 = vrcp.pop %v708
  %v749 = vmul.f32 1.0, %v748
  %v750 = vrcp.pop %v709
  %v751 = vmul.f32 1.0, %v750
  %v752 = vrcp.pop %v710
  %v753 = vmul.f32 1.0, %v752
  %v754 = vrcp.pop %v711
  %v755 = vmul.f32 1.0, %v754
  %v756 = vrcp.pop %v712
  %v757 = vmul.f32 1.0, %v756
  %v758 = vrcp.pop %v713
  %v759 = vmul.f32 1.0, %v758
  %v760 = vrcp.pop %v714
  %v761 = vmul.f32 1.0, %v760
  %v762 = vrcp.pop %v715
  %v763 = vmul.f32 1.0, %v762
  %v764 = vrcp.pop %v716
  %v765 = vmul.f32 1.0, %v764
  %v766 = vrcp.pop %v717
  %v767 = vmul.f32 1.0, %v766
  %vm768 = vcmask 7168
  %769 = vst.msk [vmem:[%s5] sm:$0xff] %vm768, %v719
  %770 = vst.msk [vmem:[%s5 + $0x8] sm:$0xff] %vm768, %v721
  %771 = vst.msk [vmem:[%s5 + $0x10] sm:$0xff] %vm768, %v723
  %772 = vst.msk [vmem:[%s5 + $0x18] sm:$0xff] %vm768, %v725
  %773 = vst.msk [vmem:[%s5 + $0x20] sm:$0xff] %vm768, %v727
  %774 = vst.msk [vmem:[%s5 + $0x28] sm:$0xff] %vm768, %v729
  %775 = vst.msk [vmem:[%s5 + $0x30] sm:$0xff] %vm768, %v731
  %776 = vst.msk [vmem:[%s5 + $0x38] sm:$0xff] %vm768, %v733
  %777 = vst.msk [vmem:[%s5 + $0x40] sm:$0xff] %vm768, %v735
  %778 = vst.msk [vmem:[%s5 + $0x48] sm:$0xff] %vm768, %v737
  %779 = vst.msk [vmem:[%s5 + $0x50] sm:$0xff] %vm768, %v739
  %780 = vst.msk [vmem:[%s5 + $0x58] sm:$0xff] %vm768, %v741
  %781 = vst.msk [vmem:[%s5 + $0x60] sm:$0xff] %vm768, %v743
  %782 = vst.msk [vmem:[%s5 + $0x68] sm:$0xff] %vm768, %v745
  %783 = vst.msk [vmem:[%s5 + $0x70] sm:$0xff] %vm768, %v747
  %784 = vst.msk [vmem:[%s5 + $0x78] sm:$0xff] %vm768, %v749
  %785 = vst.msk [vmem:[%s5 + $0x80] sm:$0xff] %vm768, %v751
  %786 = vst.msk [vmem:[%s5 + $0x88] sm:$0xff] %vm768, %v753
  %787 = vst.msk [vmem:[%s5 + $0x90] sm:$0xff] %vm768, %v755
  %788 = vst.msk [vmem:[%s5 + $0x98] sm:$0xff] %vm768, %v757
  %789 = vst.msk [vmem:[%s5 + $0xa0] sm:$0xff] %vm768, %v759
  %790 = vst.msk [vmem:[%s5 + $0xa8] sm:$0xff] %vm768, %v761
  %791 = vst.msk [vmem:[%s5 + $0xb0] sm:$0xff] %vm768, %v763
  %792 = vst.msk [vmem:[%s5 + $0xb8] sm:$0xff] %vm768, %v765
  %793 = vst.msk [vmem:[%s5 + $0xc0] sm:$0xff] %vm768, %v767
  %v794 = vsub.f32 1.0, %v719
  %v795 = vsub.f32 1.0, %v721
  %v796 = vsub.f32 1.0, %v723
  %v797 = vsub.f32 1.0, %v725
  %v798 = vsub.f32 1.0, %v727
  %v799 = vsub.f32 1.0, %v729
  %v800 = vsub.f32 1.0, %v731
  %v801 = vsub.f32 1.0, %v733
  %v802 = vsub.f32 1.0, %v735
  %v803 = vsub.f32 1.0, %v737
  %v804 = vsub.f32 1.0, %v739
  %v805 = vsub.f32 1.0, %v741
  %v806 = vsub.f32 1.0, %v743
  %v807 = vsub.f32 1.0, %v745
  %v808 = vsub.f32 1.0, %v747
  %v809 = vsub.f32 1.0, %v749
  %v810 = vsub.f32 1.0, %v751
  %v811 = vsub.f32 1.0, %v753
  %v812 = vsub.f32 1.0, %v755
  %v813 = vsub.f32 1.0, %v757
  %v814 = vsub.f32 1.0, %v759
  %v815 = vsub.f32 1.0, %v761
  %v816 = vsub.f32 1.0, %v763
  %v817 = vsub.f32 1.0, %v765
  %v818 = vsub.f32 1.0, %v767
  %844 = vrot.lane.b32.xlu0 %v794, 1
  %v845 = vpop.permute.xlu0 %844
  %846 = vrot.lane.b32.xlu0 %v795, 1
  %v847 = vpop.permute.xlu0 %846
  %848 = vrot.lane.b32.xlu0 %v796, 1
  %v849 = vpop.permute.xlu0 %848
  %850 = vrot.lane.b32.xlu0 %v797, 1
  %v851 = vpop.permute.xlu0 %850
  %852 = vrot.lane.b32.xlu0 %v798, 1
  %v853 = vpop.permute.xlu0 %852
  %854 = vrot.lane.b32.xlu0 %v799, 1
  %v855 = vpop.permute.xlu0 %854
  %856 = vrot.lane.b32.xlu0 %v800, 1
  %v857 = vpop.permute.xlu0 %856
  %858 = vrot.lane.b32.xlu0 %v801, 1
  %v859 = vpop.permute.xlu0 %858
  %860 = vrot.lane.b32.xlu0 %v802, 1
  %v861 = vpop.permute.xlu0 %860
  %862 = vrot.lane.b32.xlu0 %v803, 1
  %v863 = vpop.permute.xlu0 %862
  %864 = vrot.lane.b32.xlu0 %v804, 1
  %v865 = vpop.permute.xlu0 %864
  %866 = vrot.lane.b32.xlu0 %v805, 1
  %v867 = vpop.permute.xlu0 %866
  %868 = vrot.lane.b32.xlu0 %v806, 1
  %v869 = vpop.permute.xlu0 %868
  %870 = vrot.lane.b32.xlu0 %v807, 1
  %v871 = vpop.permute.xlu0 %870
  %872 = vrot.lane.b32.xlu0 %v808, 1
  %v873 = vpop.permute.xlu0 %872
  %874 = vrot.lane.b32.xlu0 %v809, 1
  %v875 = vpop.permute.xlu0 %874
  %876 = vrot.lane.b32.xlu0 %v810, 1
  %v877 = vpop.permute.xlu0 %876
  %878 = vrot.lane.b32.xlu0 %v811, 1
  %v879 = vpop.permute.xlu0 %878
  %880 = vrot.lane.b32.xlu0 %v812, 1
  %v881 = vpop.permute.xlu0 %880
  %882 = vrot.lane.b32.xlu0 %v813, 1
  %v883 = vpop.permute.xlu0 %882
  %884 = vrot.lane.b32.xlu0 %v814, 1
  %v885 = vpop.permute.xlu0 %884
  %886 = vrot.lane.b32.xlu0 %v815, 1
  %v887 = vpop.permute.xlu0 %886
  %888 = vrot.lane.b32.xlu0 %v816, 1
  %v889 = vpop.permute.xlu0 %888
  %890 = vrot.lane.b32.xlu0 %v817, 1
  %v891 = vpop.permute.xlu0 %890
  %892 = vrot.lane.b32.xlu0 %v818, 1
  %v893 = vpop.permute.xlu0 %892
  %vm919 = vcmask 15368
  %920 = vst.msk [vmem:[%s5] sm:$0xff] %vm919, %v845
  %921 = vst.msk [vmem:[%s5 + $0x8] sm:$0xff] %vm919, %v847
  %922 = vst.msk [vmem:[%s5 + $0x10] sm:$0xff] %vm919, %v849
  %923 = vst.msk [vmem:[%s5 + $0x18] sm:$0xff] %vm919, %v851
  %924 = vst.msk [vmem:[%s5 + $0x20] sm:$0xff] %vm919, %v853
  %925 = vst.msk [vmem:[%s5 + $0x28] sm:$0xff] %vm919, %v855
  %926 = vst.msk [vmem:[%s5 + $0x30] sm:$0xff] %vm919, %v857
  %927 = vst.msk [vmem:[%s5 + $0x38] sm:$0xff] %vm919, %v859
  %928 = vst.msk [vmem:[%s5 + $0x40] sm:$0xff] %vm919, %v861
  %929 = vst.msk [vmem:[%s5 + $0x48] sm:$0xff] %vm919, %v863
  %930 = vst.msk [vmem:[%s5 + $0x50] sm:$0xff] %vm919, %v865
  %931 = vst.msk [vmem:[%s5 + $0x58] sm:$0xff] %vm919, %v867
  %932 = vst.msk [vmem:[%s5 + $0x60] sm:$0xff] %vm919, %v869
  %933 = vst.msk [vmem:[%s5 + $0x68] sm:$0xff] %vm919, %v871
  %934 = vst.msk [vmem:[%s5 + $0x70] sm:$0xff] %vm919, %v873
  %935 = vst.msk [vmem:[%s5 + $0x78] sm:$0xff] %vm919, %v875
  %936 = vst.msk [vmem:[%s5 + $0x80] sm:$0xff] %vm919, %v877
  %937 = vst.msk [vmem:[%s5 + $0x88] sm:$0xff] %vm919, %v879
  %938 = vst.msk [vmem:[%s5 + $0x90] sm:$0xff] %vm919, %v881
  %939 = vst.msk [vmem:[%s5 + $0x98] sm:$0xff] %vm919, %v883
  %940 = vst.msk [vmem:[%s5 + $0xa0] sm:$0xff] %vm919, %v885
  %941 = vst.msk [vmem:[%s5 + $0xa8] sm:$0xff] %vm919, %v887
  %942 = vst.msk [vmem:[%s5 + $0xb0] sm:$0xff] %vm919, %v889
  %943 = vst.msk [vmem:[%s5 + $0xb8] sm:$0xff] %vm919, %v891
  %944 = vst.msk [vmem:[%s5 + $0xc0] sm:$0xff] %vm919, %v893
  // Predicated region
  $region22: #{tpu_custom_call.1} parent=0 // pred_check
    _
  $region23: #{tpu_custom_call.1} parent=0 // pred_check_branch
    %946 = sbr.rel (0) target = $region25
  $region24: #{tpu_custom_call.1} parent=0 // pred_region
    _
  $region25: #{tpu_custom_call.1} parent=0 // pred_fallthru
    _
  // Predicated region
  $region26: #{tpu_custom_call.1} parent=0 // pred_check
    _
  $region27: #{tpu_custom_call.1} parent=0 // pred_check_branch
    %948 = sbr.rel (0) target = $region29
  $region28: #{tpu_custom_call.1} parent=0 // pred_region
    _
  $region29: #{tpu_custom_call.1} parent=0 // pred_fallthru
    _

</llo_original>
